<compile_context>
chip_gen: v5e
topology: v5e:2x2
jax: 0.10.0
libtpu: 0.0.40
codegen_flags: <defaults>
</compile_context>

<pallas_src>
import jax
import jax.numpy as jnp
from jax import lax
from jax.experimental import pallas as pl
from jax.experimental.pallas import tpu as pltpu


# ---------------------------------------------------------------------------
# helpers
# ---------------------------------------------------------------------------
def _round_up(x: int, m: int) -> int:
    return ((x + m - 1) // m) * m


def _pick_tile(n: int, cap: int = 512) -> int:
    """Largest of (cap, 256, 128) that divides n (n is a multiple of 128)."""
    for t in (cap, 256, 128):
        if n % t == 0:
            return t
    return 128


# ---------------------------------------------------------------------------
# kernel 1: row-tiled linear projection  y = z @ W + b   (W pre-transposed)
# ---------------------------------------------------------------------------
def _project_kernel(z_ref, w_ref, b_ref, out_ref):
    y = jnp.dot(z_ref[...], w_ref[...], preferred_element_type=jnp.float32)
    out_ref[...] = (y + b_ref[...]).astype(out_ref.dtype)


def _project(z, w_t, b_row, tm):
    """z: (N, D) padded, w_t: (D, D) padded (in, out), b_row: (1, D) padded."""
    n, d = z.shape
    # TODO(synk): for very large D the resident (D, D) weight should itself be
    # K-tiled; fine for the dims this module is used at.
    return pl.pallas_call(
        _project_kernel,
        out_shape=jax.ShapeDtypeStruct((n, d), jnp.float32),
        grid=(n // tm,),
        in_specs=[
            pl.BlockSpec((tm, d), lambda i: (i, 0)),   # streams row tiles
            pl.BlockSpec((d, d), lambda i: (0, 0)),    # weight stays resident
            pl.BlockSpec((1, d), lambda i: (0, 0)),    # bias stays resident
        ],
        out_specs=pl.BlockSpec((tm, d), lambda i: (i, 0)),
        compiler_params=pltpu.CompilerParams(
            dimension_semantics=("parallel",),
        ),
    )(z, w_t, b_row)


# ---------------------------------------------------------------------------
# kernel 2: tiled NT matmul  out = A @ B.T  (contract on feature axis)
# ---------------------------------------------------------------------------
def _sim_kernel(a_ref, b_ref, out_ref, acc_ref):
    @pl.when(pl.program_id(2) == 0)
    def _():
        acc_ref[...] = jnp.zeros_like(acc_ref)

    # NT contraction on the feature dim: no explicit b.T / XLU transpose.
    acc_ref[...] += lax.dot_general(
        a_ref[...],
        b_ref[...],
        dimension_numbers=(((1,), (1,)), ((), ())),
        preferred_element_type=jnp.float32,
    )

    @pl.when(pl.program_id(2) == pl.num_programs(2) - 1)
    def _():
        out_ref[...] = acc_ref[...].astype(out_ref.dtype)


def _sim_matmul(a, b, tm, tn, tk):
    ns, d = a.shape
    nt, _ = b.shape
    return pl.pallas_call(
        _sim_kernel,
        out_shape=jax.ShapeDtypeStruct((ns, nt), jnp.float32),
        grid=(ns // tm, nt // tn, d // tk),
        in_specs=[
            pl.BlockSpec((tm, tk), lambda i, j, k: (i, k)),
            pl.BlockSpec((tn, tk), lambda i, j, k: (j, k)),
        ],
        out_specs=pl.BlockSpec((tm, tn), lambda i, j, k: (i, j)),
        scratch_shapes=[pltpu.VMEM((tm, tn), jnp.float32)],
        compiler_params=pltpu.CompilerParams(
            dimension_semantics=("parallel", "parallel", "arbitrary"),
        ),
    )(a, b)


# ---------------------------------------------------------------------------
# wrapper: PyTorch Linear convention (weight (out, in), bias (out,))
# ---------------------------------------------------------------------------
def similarity(z_src, z_tgt, w_a, b_a, w_b, b_b):
    """z_src: (Ns, D), z_tgt: (Nt, D); w_*: (D, D) torch layout; b_*: (D,).
    Returns the (Ns, Nt) float32 similarity matrix."""
    ns, d = z_src.shape
    nt, d2 = z_tgt.shape
    assert d == d2 and w_a.shape == (d, d) and w_b.shape == (d, d)

    f32 = jnp.float32
    dp = _round_up(d, 128)
    nsp = _round_up(ns, 128)
    ntp = _round_up(nt, 128)
    tm = _pick_tile(nsp)
    tn = _pick_tile(ntp)
    tk = _pick_tile(dp)

    # Zero-pad to lane-dense, tile-aligned shapes.  Padded rows only add rows
    # beyond (ns, nt) in the output (sliced off); padded feature columns carry
    # zero weights/bias so they contribute nothing to the contraction.
    zsp = jnp.zeros((nsp, dp), f32).at[:ns, :d].set(z_src.astype(f32))
    ztp = jnp.zeros((ntp, dp), f32).at[:nt, :d].set(z_tgt.astype(f32))
    wap = jnp.zeros((dp, dp), f32).at[:d, :d].set(w_a.T.astype(f32))
    wbp = jnp.zeros((dp, dp), f32).at[:d, :d].set(w_b.T.astype(f32))
    bap = jnp.zeros((1, dp), f32).at[0, :d].set(b_a.astype(f32))
    bbp = jnp.zeros((1, dp), f32).at[0, :d].set(b_b.astype(f32))

    a = _project(zsp, wap, bap, tm)          # A(z_src): (Nsp, Dp)
    b = _project(ztp, wbp, bbp, tn)          # B(z_tgt): (Ntp, Dp)
    out = _sim_matmul(a, b, tm, tn, tk)      # (Nsp, Ntp)
    return out[:ns, :nt]


# ---------------------------------------------------------------------------
# demo / correctness check
# ---------------------------------------------------------------------------
if __name__ == "__main__":
    dim = 32
    n_src, n_tgt = 8, 8

    key = jax.random.PRNGKey(0)
    k_zs, k_zt, k_wa, k_ba, k_wb, k_bb = jax.random.split(key, 6)

    z_src = jax.random.normal(k_zs, (n_src, dim), dtype=jnp.float32)
    z_tgt = jax.random.normal(k_zt, (n_tgt, dim), dtype=jnp.float32)

    # nn.Linear(dim, dim): weight (out, in), bias (out,). Deterministic init.
    bound = 1.0 / (dim ** 0.5)
    w_a = jax.random.uniform(k_wa, (dim, dim), minval=-bound, maxval=bound)
    b_a = jax.random.uniform(k_ba, (dim,), minval=-bound, maxval=bound)
    w_b = jax.random.uniform(k_wb, (dim, dim), minval=-bound, maxval=bound)
    b_b = jax.random.uniform(k_bb, (dim,), minval=-bound, maxval=bound)

    out = similarity(z_src, z_tgt, w_a, b_a, w_b, b_b)
    out = jax.block_until_ready(out)

    # Pure-JAX reference check.
    ref = (z_src @ w_a.T + b_a) @ (z_tgt @ w_b.T + b_b).T
    assert out.shape == (n_src, n_tgt)
    assert jnp.allclose(out, ref, atol=1e-4, rtol=1e-4)

    print("KERNEL_OK")
</pallas_src>

<mosaic_0001>
module attributes {stable_mosaic.version = 11 : i64} {
  func.func @_project_kernel(%arg0: i32, %arg1: memref<128x128xf32, #tpu.memory_space<vmem>>, %arg2: memref<128x128xf32, #tpu.memory_space<vmem>>, %arg3: memref<1x128xf32, #tpu.memory_space<vmem>>, %arg4: memref<128x128xf32, #tpu.memory_space<vmem>>) attributes {dimension_semantics = [#tpu.dimension_semantics<parallel>], iteration_bounds = array<i64: 1>, scalar_prefetch = 0 : i64, scratch_operands = 0 : i64, tpu.core_type = #tpu.core_type<tc>, window_params = [{transform_indices = @transform_0, window_bounds = array<i64: 128, 128>}, {pipeline_mode = #tpu.pipeline_mode<synchronous>, transform_indices = @transform_1, window_bounds = array<i64: 128, 128>}, {pipeline_mode = #tpu.pipeline_mode<synchronous>, transform_indices = @transform_2, window_bounds = array<i64: 1, 128>}, {transform_indices = @transform_3, window_bounds = array<i64: 128, 128>}]} {
    %c0 = arith.constant 0 : index
    %c0_0 = arith.constant 0 : index
    %0 = vector.load %arg1[%c0, %c0_0] : memref<128x128xf32, #tpu.memory_space<vmem>>, vector<128x128xf32>
    %c0_1 = arith.constant 0 : index
    %c0_2 = arith.constant 0 : index
    %1 = vector.load %arg2[%c0_1, %c0_2] : memref<128x128xf32, #tpu.memory_space<vmem>>, vector<128x128xf32>
    %cst = arith.constant dense<0.000000e+00> : vector<128x128xf32>
    %2 = tpu.matmul %0, %1, %cst {dimension_numbers = #tpu.dot_dimension_numbers<[1], [0], [0], [1], [0, 0, 1, 1], [], []>} : vector<128x128xf32>, vector<128x128xf32>, vector<128x128xf32> -> vector<128x128xf32>
    %c0_3 = arith.constant 0 : index
    %c0_4 = arith.constant 0 : index
    %3 = vector.load %arg3[%c0_3, %c0_4] : memref<1x128xf32, #tpu.memory_space<vmem>>, vector<1x128xf32>
    %4 = vector.broadcast %3 : vector<1x128xf32> to vector<128x128xf32>
    %5 = arith.addf %2, %4 : vector<128x128xf32>
    %c0_5 = arith.constant 0 : index
    %c0_6 = arith.constant 0 : index
    %6 = vector.load %arg4[%c0_5, %c0_6] : memref<128x128xf32, #tpu.memory_space<vmem>>, vector<128x128xf32>
    tpu.vector_store %arg4[%c0_5, %c0_6], %5 {strides = array<i32>} : memref<128x128xf32, #tpu.memory_space<vmem>>, vector<128x128xf32>,
    return
  }
  func.func @transform_0(%arg0: i32) -> (i32, i32) {
    %c0_i32 = arith.constant 0 : i32
    %c0_i32_0 = arith.constant 0 : i32
    return %arg0, %c0_i32 : i32, i32
  }
  func.func @transform_1(%arg0: i32) -> (i32, i32) {
    %c0_i32 = arith.constant 0 : i32
    %c0_i32_0 = arith.constant 0 : i32
    %c0_i32_1 = arith.constant 0 : i32
    return %c0_i32, %c0_i32_0 : i32, i32
  }
  func.func @transform_2(%arg0: i32) -> (i32, i32) {
    %c0_i32 = arith.constant 0 : i32
    %c0_i32_0 = arith.constant 0 : i32
    %c0_i32_1 = arith.constant 0 : i32
    return %c0_i32, %c0_i32_0 : i32, i32
  }
  func.func @transform_3(%arg0: i32) -> (i32, i32) {
    %c0_i32 = arith.constant 0 : i32
    %c0_i32_0 = arith.constant 0 : i32
    return %arg0, %c0_i32 : i32, i32
  }
}

</mosaic_0001>

<llo_original>
// kernel: tpu_custom_call.1
$region0: #{tpu_custom_call.1}
  #allocation0 [shape = 'u32[]', space=smem, size = 0x4, offset = 0x4, fixed_abs, tag = 'smem constant byte address 0x4 - core index']
  #allocation1 [shape = 'u32[72,128]{1,0:T(1,128)}', space=vmem, size = 0x9000, scoped, tag = 'internal scratch']
  %s0 = inlined_call_operand.hbm [shape: f32[128,128], index: 0, kind: input, shape index: {}]
  %s1 = inlined_call_operand.hbm [shape: f32[128,128], index: 1, kind: input, shape index: {}]
  %s2 = inlined_call_operand.vmem [shape: f32[1,128], index: 2, kind: input, shape index: {}]
  %s3 = inlined_call_operand.hbm [shape: f32[128,128], index: 3, kind: output, shape index: {}]
  %s4 = sld [smem:[#allocation0]]
  $region30: #{tpu_custom_call.1} parent=0
    _
  %s6 = ssub.s32 1, %s4
  %s7 = scalar_select 0, %s6, %s4
  $region1: #{tpu_custom_call.1} parent=0
    #allocation2 [shape = 'u8[65536]{0}', space=vmem, size = 0x10000, scoped, tag = 'input window, operand 0, single buffered']
    #allocation3 [shape = 's32[1]{0}', space=sflag, size = 0x4, scoped, tag = 'scoped memory for tpu_custom_call.1']
    #allocation4 [shape = 's32[1]{0}', space=sflag, size = 0x4, scoped, tag = 'scoped memory for tpu_custom_call.1']
    #allocation5 [shape = 'u8[65536]{0}', space=vmem, size = 0x10000, scoped, tag = 'input window, operand 1, single buffered']
    #allocation6 [shape = 's32[1]{0}', space=sflag, size = 0x4, scoped, tag = 'scoped memory for tpu_custom_call.1']
    #allocation7 [shape = 'u8[65536]{0}', space=vmem, size = 0x10000, scoped, tag = 'output window, operand 0, single buffered']
    %8 = vsyncpa [#allocation3], 0
    %9 = vsyncpa [#allocation6], 0
    %10 = vsyncpa [#allocation4], 0
    // Predicated region
    $region2: #{tpu_custom_call.1} parent=1 // pred_check
      _
    $region3: #{tpu_custom_call.1} parent=1 // pred_check_branch
      %12 = sbr.rel (0) target = $region5
    $region4: #{tpu_custom_call.1} parent=1 // pred_region
      %14 = vsyncadd [#allocation3], 0
      %s15 = sshll.u32 %s0, 4
      %s16 = int_to_ptr.hbm [resolvable:$true] %s15
      %s17 = sshll.u32 [#allocation2], 4
      %s18 = int_to_ptr.vmem [resolvable:$true] %s17
      %23 = dma.hbm_to_vmem [thread:$0]  %s16, 2048, %s18, [#allocation3], 128, 128, 8
    $region5: #{tpu_custom_call.1} parent=1 // pred_fallthru
      _
    // Predicated region
    $region6: #{tpu_custom_call.1} parent=1 // pred_check
      _
    $region7: #{tpu_custom_call.1} parent=1 // pred_check_branch
      %25 = sbr.rel (0) target = $region9
    $region8: #{tpu_custom_call.1} parent=1 // pred_region
      %27 = vsyncadd [#allocation6], 0
      %s28 = sshll.u32 %s1, 4
      %s29 = int_to_ptr.hbm [resolvable:$true] %s28
      %s30 = sshll.u32 [#allocation5], 4
      %s31 = int_to_ptr.vmem [resolvable:$true] %s30
      %36 = dma.hbm_to_vmem [thread:$0]  %s29, 2048, %s31, [#allocation6], 128, 128, 8
    $region9: #{tpu_custom_call.1} parent=1 // pred_fallthru
      _
    // Predicated region
    $region10: #{tpu_custom_call.1} parent=1 // pred_check
      _
    $region11: #{tpu_custom_call.1} parent=1 // pred_check_branch
      %38 = sbr.rel (0) target = $region13
    $region12: #{tpu_custom_call.1} parent=1 // pred_region
      _
    $region13: #{tpu_custom_call.1} parent=1 // pred_fallthru
      _
    // Predicated region
    $region14: #{tpu_custom_call.1} parent=1 // pred_check
      _
    $region15: #{tpu_custom_call.1} parent=1 // pred_check_branch
      %40 = sbr.rel (0) target = $region17
    $region16: #{tpu_custom_call.1} parent=1 // pred_region
      %42 = dma.done [#allocation3], 2048
    $region17: #{tpu_custom_call.1} parent=1 // pred_fallthru
      _
    // Predicated region
    $region18: #{tpu_custom_call.1} parent=1 // pred_check
      _
    $region19: #{tpu_custom_call.1} parent=1 // pred_check_branch
      %44 = sbr.rel (0) target = $region21
    $region20: #{tpu_custom_call.1} parent=1 // pred_region
      %46 = dma.done [#allocation6], 2048
    $region21: #{tpu_custom_call.1} parent=1 // pred_fallthru
      _
    %v47 = vld [vmem:[#allocation2] sm:$0xff]
    %v48 = vld [vmem:[#allocation2 + $0x8] sm:$0xff]
    %v49 = vld [vmem:[#allocation2 + $0x10] sm:$0xff]
    %v50 = vld [vmem:[#allocation2 + $0x18] sm:$0xff]
    %v51 = vld [vmem:[#allocation2 + $0x20] sm:$0xff]
    %v52 = vld [vmem:[#allocation2 + $0x28] sm:$0xff]
    %v53 = vld [vmem:[#allocation2 + $0x30] sm:$0xff]
    %v54 = vld [vmem:[#allocation2 + $0x38] sm:$0xff]
    %v55 = vld [vmem:[#allocation2 + $0x40] sm:$0xff]
    %v56 = vld [vmem:[#allocation2 + $0x48] sm:$0xff]
    %v57 = vld [vmem:[#allocation2 + $0x50] sm:$0xff]
    %v58 = vld [vmem:[#allocation2 + $0x58] sm:$0xff]
    %v59 = vld [vmem:[#allocation2 + $0x60] sm:$0xff]
    %v60 = vld [vmem:[#allocation2 + $0x68] sm:$0xff]
    %v61 = vld [vmem:[#allocation2 + $0x70] sm:$0xff]
    %v62 = vld [vmem:[#allocation2 + $0x78] sm:$0xff]
    %v63 = vld [vmem:[#allocation5] sm:$0xff]
    %v64 = vld [vmem:[#allocation5 + $0x8] sm:$0xff]
    %v65 = vld [vmem:[#allocation5 + $0x10] sm:$0xff]
    %v66 = vld [vmem:[#allocation5 + $0x18] sm:$0xff]
    %v67 = vld [vmem:[#allocation5 + $0x20] sm:$0xff]
    %v68 = vld [vmem:[#allocation5 + $0x28] sm:$0xff]
    %v69 = vld [vmem:[#allocation5 + $0x30] sm:$0xff]
    %v70 = vld [vmem:[#allocation5 + $0x38] sm:$0xff]
    %v71 = vld [vmem:[#allocation5 + $0x40] sm:$0xff]
    %v72 = vld [vmem:[#allocation5 + $0x48] sm:$0xff]
    %v73 = vld [vmem:[#allocation5 + $0x50] sm:$0xff]
    %v74 = vld [vmem:[#allocation5 + $0x58] sm:$0xff]
    %v75 = vld [vmem:[#allocation5 + $0x60] sm:$0xff]
    %v76 = vld [vmem:[#allocation5 + $0x68] sm:$0xff]
    %v77 = vld [vmem:[#allocation5 + $0x70] sm:$0xff]
    %v78 = vld [vmem:[#allocation5 + $0x78] sm:$0xff]
    %v79 = vld [vmem:[%s2] sm:$0x1]
    %v81 = vperm.slane %v79, 0
    %83 = vmatpush.msra.mxu0 %v78
    %84 = vmatpush.msra.mxu0 %v77
    %85 = vmatpush.msra.mxu0 %v76
    %86 = vmatpush.msra.mxu0 %v75
    %87 = vmatpush.msra.mxu0 %v74
    %88 = vmatpush.msra.mxu0 %v73
    %89 = vmatpush.msra.mxu0 %v72
    %90 = vmatpush.msra.mxu0 %v71
    %91 = vmatpush.msra.mxu0 %v70
    %92 = vmatpush.msra.mxu0 %v69
    %93 = vmatpush.msra.mxu0 %v68
    %94 = vmatpush.msra.mxu0 %v67
    %95 = vmatpush.msra.mxu0 %v66
    %96 = vmatpush.msra.mxu0 %v65
    %97 = vmatpush.msra.mxu0 %v64
    %98 = vmatpush.msra.mxu0 %v63
    %99 = vmatmul.f32.gmra.mxu0 %v47
    %v100 = vpop.f32.mrf.mxu0
    %v101 = vadd.f32 %v81, %v100
    %102 = vmatmul.f32.gmra.mxu0 %v48
    %v103 = vpop.f32.mrf.mxu0
    %v104 = vadd.f32 %v81, %v103
    %105 = vmatmul.f32.gmra.mxu0 %v49
    %v106 = vpop.f32.mrf.mxu0
    %v107 = vadd.f32 %v81, %v106
    %108 = vmatmul.f32.gmra.mxu0 %v50
    %v109 = vpop.f32.mrf.mxu0
    %v110 = vadd.f32 %v81, %v109
    %111 = vmatmul.f32.gmra.mxu0 %v51
    %v112 = vpop.f32.mrf.mxu0
    %v113 = vadd.f32 %v81, %v112
    %114 = vmatmul.f32.gmra.mxu0 %v52
    %v115 = vpop.f32.mrf.mxu0
    %v116 = vadd.f32 %v81, %v115
    %117 = vmatmul.f32.gmra.mxu0 %v53
    %v118 = vpop.f32.mrf.mxu0
    %v119 = vadd.f32 %v81, %v118
    %120 = vmatmul.f32.gmra.mxu0 %v54
    %v121 = vpop.f32.mrf.mxu0
    %v122 = vadd.f32 %v81, %v121
    %123 = vmatmul.f32.gmra.mxu0 %v55
    %v124 = vpop.f32.mrf.mxu0
    %v125 = vadd.f32 %v81, %v124
    %126 = vmatmul.f32.gmra.mxu0 %v56
    %v127 = vpop.f32.mrf.mxu0
    %v128 = vadd.f32 %v81, %v127
    %129 = vmatmul.f32.gmra.mxu0 %v57
    %v130 = vpop.f32.mrf.mxu0
    %v131 = vadd.f32 %v81, %v130
    %132 = vmatmul.f32.gmra.mxu0 %v58
    %v133 = vpop.f32.mrf.mxu0
    %v134 = vadd.f32 %v81, %v133
    %135 = vmatmul.f32.gmra.mxu0 %v59
    %v136 = vpop.f32.mrf.mxu0
    %v137 = vadd.f32 %v81, %v136
    %138 = vmatmul.f32.gmra.mxu0 %v60
    %v139 = vpop.f32.mrf.mxu0
    %v140 = vadd.f32 %v81, %v139
    %141 = vmatmul.f32.gmra.mxu0 %v61
    %v142 = vpop.f32.mrf.mxu0
    %v143 = vadd.f32 %v81, %v142
    %144 = vmatmul.f32.gmra.mxu0 %v62
    %v145 = vpop.f32.mrf.mxu0
    %v146 = vadd.f32 %v81, %v145
    %147 = vdwg.mxu0
    %148 = vst [vmem:[#allocation7] sm:$0xff] %v101
    %149 = vst [vmem:[#allocation7 + $0x8] sm:$0xff] %v104
    %150 = vst [vmem:[#allocation7 + $0x10] sm:$0xff] %v107
    %151 = vst [vmem:[#allocation7 + $0x18] sm:$0xff] %v110
    %152 = vst [vmem:[#allocation7 + $0x20] sm:$0xff] %v113
    %153 = vst [vmem:[#allocation7 + $0x28] sm:$0xff] %v116
    %154 = vst [vmem:[#allocation7 + $0x30] sm:$0xff] %v119
    %155 = vst [vmem:[#allocation7 + $0x38] sm:$0xff] %v122
    %156 = vst [vmem:[#allocation7 + $0x40] sm:$0xff] %v125
    %157 = vst [vmem:[#allocation7 + $0x48] sm:$0xff] %v128
    %158 = vst [vmem:[#allocation7 + $0x50] sm:$0xff] %v131
    %159 = vst [vmem:[#allocation7 + $0x58] sm:$0xff] %v134
    %160 = vst [vmem:[#allocation7 + $0x60] sm:$0xff] %v137
    %161 = vst [vmem:[#allocation7 + $0x68] sm:$0xff] %v140
    %162 = vst [vmem:[#allocation7 + $0x70] sm:$0xff] %v143
    %163 = vst [vmem:[#allocation7 + $0x78] sm:$0xff] %v146
    // Predicated region
    $region22: #{tpu_custom_call.1} parent=1 // pred_check
      _
    $region23: #{tpu_custom_call.1} parent=1 // pred_check_branch
      %165 = sbr.rel (0) target = $region25
    $region24: #{tpu_custom_call.1} parent=1 // pred_region
      %167 = vsyncadd [#allocation4], 0
      %s168 = sshll.u32 [#allocation7], 4
      %s169 = int_to_ptr.vmem [resolvable:$true] %s168
      %s170 = sshll.u32 %s3, 4
      %s171 = int_to_ptr.hbm [resolvable:$true] %s170
      %176 = dma.vmem_to_hbm [thread:$0]  %s169, 2048, %s171, [#allocation4], 128, 128, 8
    $region25: #{tpu_custom_call.1} parent=1 // pred_fallthru
      _
    // Predicated region
    $region26: #{tpu_custom_call.1} parent=1 // pred_check
      _
    $region27: #{tpu_custom_call.1} parent=1 // pred_check_branch
      %178 = sbr.rel (0) target = $region29
    $region28: #{tpu_custom_call.1} parent=1 // pred_region
      %180 = dma.done [#allocation4], 2048
    $region29: #{tpu_custom_call.1} parent=1 // pred_fallthru
      _
    %181 = vsyncpa [#allocation3], 1
    %182 = vsyncpa [#allocation6], 1
    %183 = vsyncpa [#allocation4], 1

</llo_original>
